<compile_context>
chip_gen: v7x
topology: tpu7x:2x2x1
jax: 0.10.0
libtpu: 0.0.40
codegen_flags: <defaults>
</compile_context>

<pallas_src>
import jax
import jax.numpy as jnp
from jax.experimental import pallas as pl
from jax.experimental.pallas import tpu as pltpu

LANE = 128


def _round_up(n, m):
    return (n + m - 1) // m * m


def _leaky_relu(x, slope=0.2):
    return jnp.where(x > 0, x, slope * x)


def _make_kernel(out_sizes, bias_offs):
    s0, s1, s2, s3, s4 = out_sizes
    o0, o1, o2, o3, o4 = bias_offs

    def kernel(x_ref,
               w0_ref, w1_ref, w2_ref, w3_ref, w4_ref,
               b_ref,
               latent_ref, dec_ref):
        def lin(h_f32, w_ref, off, size):
            # bf16 x bf16 on the MXU, f32 accumulation; bias add in f32 on the VPU.
            acc = jnp.dot(h_f32.astype(jnp.bfloat16), w_ref[...],
                          preferred_element_type=jnp.float32)
            return acc + b_ref[:, off:off + size]

        x = x_ref[...].astype(jnp.float32)

        # hidden0 (Dropout(0.3) is identity at inference)
        h = _leaky_relu(lin(x, w0_ref, o0, s0))   # Linear(num_feature,512)+LeakyReLU
        h = _leaky_relu(lin(h, w1_ref, o1, s1))   # Linear(512,256)+LeakyReLU

        # encoder -> latent (lane-padded; padded cols are exactly 0)
        z = _leaky_relu(lin(h, w2_ref, o2, s2))   # Linear(256,num_z)+LeakyReLU
        latent_ref[...] = z.astype(latent_ref.dtype)

        # hidden1
        h = _leaky_relu(lin(z, w3_ref, o3, s3))   # Linear(num_z,64)+LeakyReLU

        # decoder (padded cols become sigmoid(0)=0.5, sliced away in the wrapper)
        d = jax.nn.sigmoid(lin(h, w4_ref, o4, s4))  # Linear(64,num_out)+Sigmoid
        dec_ref[...] = d.astype(dec_ref.dtype)

    return kernel


def auto_encoder_forward(x, params):
    """x: (B, num_feature) f32.  params: dict from init_params.
    Returns (latent (B, num_z), decoder (B, num_out)), both f32."""
    weights = params["weights"]          # 5 lane-padded bf16 (in_p, out_p) matrices
    b_packed = params["b_packed"]        # (1, total) f32 packed, lane-aligned biases
    bias_offs = params["bias_offs"]
    num_z, num_out = params["num_z"], params["num_out"]

    B, num_feature = x.shape
    in_pad = weights[0].shape[0]
    out_sizes = tuple(w.shape[1] for w in weights)   # padded per-layer widths
    zp, dp = out_sizes[2], out_sizes[4]

    # Zero-pad the input features to the lane-aligned width (zero weight rows
    # make this a no-op mathematically).
    if num_feature < in_pad:
        x = jnp.pad(x, ((0, 0), (0, in_pad - num_feature)))

    # Batch tiling: weights stay VMEM-resident across grid steps; the batch axis
    # is "parallel" so a second TensorCore engages once B grows.
    tm = min(B, 256)
    grid = (pl.cdiv(B, tm),)

    kernel = _make_kernel(out_sizes, tuple(bias_offs))

    x_spec = pl.BlockSpec((tm, in_pad), lambda i: (i, 0))
    w_specs = [pl.BlockSpec(w.shape, lambda i: (0, 0)) for w in weights]
    b_spec = pl.BlockSpec(b_packed.shape, lambda i: (0, 0))
    out_specs = (pl.BlockSpec((tm, zp), lambda i: (i, 0)),
                 pl.BlockSpec((tm, dp), lambda i: (i, 0)))
    out_shape = (jax.ShapeDtypeStruct((B, zp), jnp.float32),
                 jax.ShapeDtypeStruct((B, dp), jnp.float32))

    latent_p, dec_p = pl.pallas_call(
        kernel,
        out_shape=out_shape,
        grid=grid,
        in_specs=[x_spec] + w_specs + [b_spec],
        out_specs=out_specs,
        compiler_params=pltpu.CompilerParams(
            dimension_semantics=("parallel",),
            vmem_limit_bytes=16 << 20,
        ),
    )(x, *weights, b_packed)

    # Strip lane padding.
    return latent_p[:, :num_z], dec_p[:, :num_out]


def init_params(key, num_feature=24, num_z=100, num_out=24):
    """PyTorch-style Linear init U(-1/sqrt(fan_in), 1/sqrt(fan_in)), then each
    layer is zero-embedded into lane-aligned (128-multiple) padded matrices and
    cast to bf16.  Biases are zero-padded and packed into one f32 row."""
    dims = [(num_feature, 512), (512, 256), (256, num_z), (num_z, 64), (64, num_out)]
    feat_chain = [num_feature, 512, 256, num_z, 64, num_out]
    padded_chain = [_round_up(d, LANE) for d in feat_chain]

    weights, biases, bias_offs = [], [], []
    off = 0
    for li, (fan_in, fan_out) in enumerate(dims):
        key, kw, kb = jax.random.split(key, 3)
        bound = float(1.0 / (fan_in ** 0.5))
        w = jax.random.uniform(kw, (fan_in, fan_out), jnp.float32, -bound, bound)
        b = jax.random.uniform(kb, (fan_out,), jnp.float32, -bound, bound)

        in_p, out_p = padded_chain[li], padded_chain[li + 1]
        w_p = jnp.zeros((in_p, out_p), jnp.float32).at[:fan_in, :fan_out].set(w)
        b_p = jnp.zeros((out_p,), jnp.float32).at[:fan_out].set(b)

        weights.append(w_p.astype(jnp.bfloat16))   # bf16 weights: half the DMA bytes
        biases.append(b_p)
        bias_offs.append(off)
        off += out_p

    b_packed = jnp.concatenate(biases).reshape(1, off)
    return {
        "weights": weights,
        "b_packed": b_packed,
        "bias_offs": tuple(bias_offs),
        "num_z": num_z,
        "num_out": num_out,
    }


def reference_forward(x, params):
    """Pure-JAX reference with identical numerics (same padded bf16 weights,
    f32 accumulation), used to validate the kernel."""
    weights = params["weights"]
    b_packed = params["b_packed"]
    bias_offs = params["bias_offs"]
    num_z, num_out = params["num_z"], params["num_out"]

    out_sizes = [w.shape[1] for w in weights]
    biases = [b_packed[0, o:o + s] for o, s in zip(bias_offs, out_sizes)]

    in_pad = weights[0].shape[0]
    xp = jnp.pad(x.astype(jnp.float32), ((0, 0), (0, in_pad - x.shape[1])))

    def lin(h, w, b):
        return jnp.dot(h.astype(jnp.bfloat16), w,
                       preferred_element_type=jnp.float32) + b

    h = _leaky_relu(lin(xp, weights[0], biases[0]))
    h = _leaky_relu(lin(h, weights[1], biases[1]))
    z = _leaky_relu(lin(h, weights[2], biases[2]))
    h = _leaky_relu(lin(z, weights[3], biases[3]))
    d = jax.nn.sigmoid(lin(h, weights[4], biases[4]))
    return z[:, :num_z], d[:, :num_out]


if __name__ == "__main__":
    num_feature, num_z, num_out, batch = 24, 100, 24, 8

    key = jax.random.PRNGKey(0)
    key, kx = jax.random.split(key)
    x = jax.random.normal(kx, (batch, num_feature), jnp.float32)
    params = init_params(key, num_feature=num_feature, num_z=num_z, num_out=num_out)

    latent, dec = auto_encoder_forward(x, params)
    latent = jax.block_until_ready(latent)
    dec = jax.block_until_ready(dec)

    latent_ref, dec_ref = reference_forward(x, params)

    assert latent.shape == (batch, num_z), latent.shape
    assert dec.shape == (batch, num_out), dec.shape
    assert jnp.allclose(latent, latent_ref, atol=1e-4, rtol=1e-4), \
        float(jnp.max(jnp.abs(latent - latent_ref)))
    assert jnp.allclose(dec, dec_ref, atol=1e-4, rtol=1e-4), \
        float(jnp.max(jnp.abs(dec - dec_ref)))

    print("KERNEL_OK")
</pallas_src>

<mosaic_0001>
module attributes {stable_mosaic.version = 11 : i64} {
  func.func @kernel(%arg0: i32, %arg1: memref<8x128xf32, #tpu.memory_space<vmem>>, %arg2: memref<128x512xbf16, #tpu.memory_space<vmem>>, %arg3: memref<512x256xbf16, #tpu.memory_space<vmem>>, %arg4: memref<256x128xbf16, #tpu.memory_space<vmem>>, %arg5: memref<128x128xbf16, #tpu.memory_space<vmem>>, %arg6: memref<128x128xbf16, #tpu.memory_space<vmem>>, %arg7: memref<1x1152xf32, #tpu.memory_space<vmem>>, %arg8: memref<8x128xf32, #tpu.memory_space<vmem>>, %arg9: memref<8x128xf32, #tpu.memory_space<vmem>>) attributes {dimension_semantics = [#tpu.dimension_semantics<parallel>], iteration_bounds = array<i64: 1>, scalar_prefetch = 0 : i64, scratch_operands = 0 : i64, tpu.core_type = #tpu.core_type<tc>, window_params = [{transform_indices = @transform_0, window_bounds = array<i64: 8, 128>}, {pipeline_mode = #tpu.pipeline_mode<synchronous>, transform_indices = @transform_1, window_bounds = array<i64: 128, 512>}, {pipeline_mode = #tpu.pipeline_mode<synchronous>, transform_indices = @transform_2, window_bounds = array<i64: 512, 256>}, {pipeline_mode = #tpu.pipeline_mode<synchronous>, transform_indices = @transform_3, window_bounds = array<i64: 256, 128>}, {pipeline_mode = #tpu.pipeline_mode<synchronous>, transform_indices = @transform_4, window_bounds = array<i64: 128, 128>}, {pipeline_mode = #tpu.pipeline_mode<synchronous>, transform_indices = @transform_5, window_bounds = array<i64: 128, 128>}, {pipeline_mode = #tpu.pipeline_mode<synchronous>, transform_indices = @transform_6, window_bounds = array<i64: 1, 1152>}, {transform_indices = @transform_7, window_bounds = array<i64: 8, 128>}, {transform_indices = @transform_8, window_bounds = array<i64: 8, 128>}]} {
    %c0 = arith.constant 0 : index
    %c0_0 = arith.constant 0 : index
    %0 = vector.load %arg1[%c0, %c0_0] : memref<8x128xf32, #tpu.memory_space<vmem>>, vector<8x128xf32>
    %1 = arith.truncf %0 : vector<8x128xf32> to vector<8x128xbf16>
    %c0_1 = arith.constant 0 : index
    %c0_2 = arith.constant 0 : index
    %2 = vector.load %arg2[%c0_1, %c0_2] : memref<128x512xbf16, #tpu.memory_space<vmem>>, vector<128x512xbf16>
    %cst = arith.constant dense<0.000000e+00> : vector<8x512xf32>
    %3 = tpu.matmul %1, %2, %cst {dimension_numbers = #tpu.dot_dimension_numbers<[1], [0], [0], [1], [0, 0, 1, 1], [], []>} : vector<8x128xbf16>, vector<128x512xbf16>, vector<8x512xf32> -> vector<8x512xf32>
    %c0_3 = arith.constant 0 : index
    %c0_4 = arith.constant 0 : index
    %4 = vector.load %arg7[%c0_3, %c0_4] : memref<1x1152xf32, #tpu.memory_space<vmem>>, vector<1x512xf32>
    %5 = vector.broadcast %4 : vector<1x512xf32> to vector<8x512xf32>
    %6 = arith.addf %3, %5 : vector<8x512xf32>
    %cst_5 = arith.constant 0.000000e+00 : f32
    %7 = vector.broadcast %cst_5 : f32 to vector<8x512xf32>
    %8 = arith.cmpf ogt, %6, %7 : vector<8x512xf32>
    %cst_6 = arith.constant 2.000000e-01 : f32
    %9 = vector.broadcast %cst_6 : f32 to vector<8x512xf32>
    %10 = arith.mulf %9, %6 : vector<8x512xf32>
    %11 = arith.select %8, %6, %10 : vector<8x512xi1>, vector<8x512xf32>
    %12 = arith.truncf %11 : vector<8x512xf32> to vector<8x512xbf16>
    %c0_7 = arith.constant 0 : index
    %c0_8 = arith.constant 0 : index
    %13 = vector.load %arg3[%c0_7, %c0_8] : memref<512x256xbf16, #tpu.memory_space<vmem>>, vector<512x256xbf16>
    %cst_9 = arith.constant dense<0.000000e+00> : vector<8x256xf32>
    %14 = tpu.matmul %12, %13, %cst_9 {dimension_numbers = #tpu.dot_dimension_numbers<[1], [0], [0], [1], [0, 0, 1, 1], [], []>} : vector<8x512xbf16>, vector<512x256xbf16>, vector<8x256xf32> -> vector<8x256xf32>
    %c0_10 = arith.constant 0 : index
    %c512 = arith.constant 512 : index
    %15 = vector.load %arg7[%c0_10, %c512] : memref<1x1152xf32, #tpu.memory_space<vmem>>, vector<1x256xf32>
    %16 = vector.broadcast %15 : vector<1x256xf32> to vector<8x256xf32>
    %17 = arith.addf %14, %16 : vector<8x256xf32>
    %cst_11 = arith.constant 0.000000e+00 : f32
    %18 = vector.broadcast %cst_11 : f32 to vector<8x256xf32>
    %19 = arith.cmpf ogt, %17, %18 : vector<8x256xf32>
    %cst_12 = arith.constant 2.000000e-01 : f32
    %20 = vector.broadcast %cst_12 : f32 to vector<8x256xf32>
    %21 = arith.mulf %20, %17 : vector<8x256xf32>
    %22 = arith.select %19, %17, %21 : vector<8x256xi1>, vector<8x256xf32>
    %23 = arith.truncf %22 : vector<8x256xf32> to vector<8x256xbf16>
    %c0_13 = arith.constant 0 : index
    %c0_14 = arith.constant 0 : index
    %24 = vector.load %arg4[%c0_13, %c0_14] : memref<256x128xbf16, #tpu.memory_space<vmem>>, vector<256x128xbf16>
    %cst_15 = arith.constant dense<0.000000e+00> : vector<8x128xf32>
    %25 = tpu.matmul %23, %24, %cst_15 {dimension_numbers = #tpu.dot_dimension_numbers<[1], [0], [0], [1], [0, 0, 1, 1], [], []>} : vector<8x256xbf16>, vector<256x128xbf16>, vector<8x128xf32> -> vector<8x128xf32>
    %c0_16 = arith.constant 0 : index
    %c768 = arith.constant 768 : index
    %26 = vector.load %arg7[%c0_16, %c768] : memref<1x1152xf32, #tpu.memory_space<vmem>>, vector<1x128xf32>
    %27 = vector.broadcast %26 : vector<1x128xf32> to vector<8x128xf32>
    %28 = arith.addf %25, %27 : vector<8x128xf32>
    %cst_17 = arith.constant 0.000000e+00 : f32
    %29 = vector.broadcast %cst_17 : f32 to vector<8x128xf32>
    %30 = arith.cmpf ogt, %28, %29 : vector<8x128xf32>
    %cst_18 = arith.constant 2.000000e-01 : f32
    %31 = vector.broadcast %cst_18 : f32 to vector<8x128xf32>
    %32 = arith.mulf %31, %28 : vector<8x128xf32>
    %33 = arith.select %30, %28, %32 : vector<8x128xi1>, vector<8x128xf32>
    %c0_19 = arith.constant 0 : index
    %c0_20 = arith.constant 0 : index
    %34 = vector.load %arg8[%c0_19, %c0_20] : memref<8x128xf32, #tpu.memory_space<vmem>>, vector<8x128xf32>
    tpu.vector_store %arg8[%c0_19, %c0_20], %33 {strides = array<i32>} : memref<8x128xf32, #tpu.memory_space<vmem>>, vector<8x128xf32>,
    %35 = arith.truncf %33 : vector<8x128xf32> to vector<8x128xbf16>
    %c0_21 = arith.constant 0 : index
    %c0_22 = arith.constant 0 : index
    %36 = vector.load %arg5[%c0_21, %c0_22] : memref<128x128xbf16, #tpu.memory_space<vmem>>, vector<128x128xbf16>
    %cst_23 = arith.constant dense<0.000000e+00> : vector<8x128xf32>
    %37 = tpu.matmul %35, %36, %cst_23 {dimension_numbers = #tpu.dot_dimension_numbers<[1], [0], [0], [1], [0, 0, 1, 1], [], []>} : vector<8x128xbf16>, vector<128x128xbf16>, vector<8x128xf32> -> vector<8x128xf32>
    %c0_24 = arith.constant 0 : index
    %c896 = arith.constant 896 : index
    %38 = vector.load %arg7[%c0_24, %c896] : memref<1x1152xf32, #tpu.memory_space<vmem>>, vector<1x128xf32>
    %39 = vector.broadcast %38 : vector<1x128xf32> to vector<8x128xf32>
    %40 = arith.addf %37, %39 : vector<8x128xf32>
    %cst_25 = arith.constant 0.000000e+00 : f32
    %41 = vector.broadcast %cst_25 : f32 to vector<8x128xf32>
    %42 = arith.cmpf ogt, %40, %41 : vector<8x128xf32>
    %cst_26 = arith.constant 2.000000e-01 : f32
    %43 = vector.broadcast %cst_26 : f32 to vector<8x128xf32>
    %44 = arith.mulf %43, %40 : vector<8x128xf32>
    %45 = arith.select %42, %40, %44 : vector<8x128xi1>, vector<8x128xf32>
    %46 = arith.truncf %45 : vector<8x128xf32> to vector<8x128xbf16>
    %c0_27 = arith.constant 0 : index
    %c0_28 = arith.constant 0 : index
    %47 = vector.load %arg6[%c0_27, %c0_28] : memref<128x128xbf16, #tpu.memory_space<vmem>>, vector<128x128xbf16>
    %cst_29 = arith.constant dense<0.000000e+00> : vector<8x128xf32>
    %48 = tpu.matmul %46, %47, %cst_29 {dimension_numbers = #tpu.dot_dimension_numbers<[1], [0], [0], [1], [0, 0, 1, 1], [], []>} : vector<8x128xbf16>, vector<128x128xbf16>, vector<8x128xf32> -> vector<8x128xf32>
    %c0_30 = arith.constant 0 : index
    %c1024 = arith.constant 1024 : index
    %49 = vector.load %arg7[%c0_30, %c1024] : memref<1x1152xf32, #tpu.memory_space<vmem>>, vector<1x128xf32>
    %50 = vector.broadcast %49 : vector<1x128xf32> to vector<8x128xf32>
    %51 = arith.addf %48, %50 : vector<8x128xf32>
    %52 = arith.negf %51 : vector<8x128xf32>
    %53 = math.exp %52 : vector<8x128xf32>
    %cst_31 = arith.constant 1.000000e+00 : f32
    %54 = vector.broadcast %cst_31 : f32 to vector<8x128xf32>
    %55 = arith.addf %54, %53 : vector<8x128xf32>
    %56 = arith.divf %54, %55 : vector<8x128xf32>
    %c0_32 = arith.constant 0 : index
    %c0_33 = arith.constant 0 : index
    %57 = vector.load %arg9[%c0_32, %c0_33] : memref<8x128xf32, #tpu.memory_space<vmem>>, vector<8x128xf32>
    tpu.vector_store %arg9[%c0_32, %c0_33], %56 {strides = array<i32>} : memref<8x128xf32, #tpu.memory_space<vmem>>, vector<8x128xf32>,
    return
  }
  func.func @transform_0(%arg0: i32) -> (i32, i32) {
    %c0_i32 = arith.constant 0 : i32
    %c0_i32_0 = arith.constant 0 : i32
    return %arg0, %c0_i32 : i32, i32
  }
  func.func @transform_1(%arg0: i32) -> (i32, i32) {
    %c0_i32 = arith.constant 0 : i32
    %c0_i32_0 = arith.constant 0 : i32
    %c0_i32_1 = arith.constant 0 : i32
    return %c0_i32, %c0_i32_0 : i32, i32
  }
  func.func @transform_2(%arg0: i32) -> (i32, i32) {
    %c0_i32 = arith.constant 0 : i32
    %c0_i32_0 = arith.constant 0 : i32
    %c0_i32_1 = arith.constant 0 : i32
    return %c0_i32, %c0_i32_0 : i32, i32
  }
  func.func @transform_3(%arg0: i32) -> (i32, i32) {
    %c0_i32 = arith.constant 0 : i32
    %c0_i32_0 = arith.constant 0 : i32
    %c0_i32_1 = arith.constant 0 : i32
    return %c0_i32, %c0_i32_0 : i32, i32
  }
  func.func @transform_4(%arg0: i32) -> (i32, i32) {
    %c0_i32 = arith.constant 0 : i32
    %c0_i32_0 = arith.constant 0 : i32
    %c0_i32_1 = arith.constant 0 : i32
    return %c0_i32, %c0_i32_0 : i32, i32
  }
  func.func @transform_5(%arg0: i32) -> (i32, i32) {
    %c0_i32 = arith.constant 0 : i32
    %c0_i32_0 = arith.constant 0 : i32
    %c0_i32_1 = arith.constant 0 : i32
    return %c0_i32, %c0_i32_0 : i32, i32
  }
  func.func @transform_6(%arg0: i32) -> (i32, i32) {
    %c0_i32 = arith.constant 0 : i32
    %c0_i32_0 = arith.constant 0 : i32
    %c0_i32_1 = arith.constant 0 : i32
    return %c0_i32, %c0_i32_0 : i32, i32
  }
  func.func @transform_7(%arg0: i32) -> (i32, i32) {
    %c0_i32 = arith.constant 0 : i32
    %c0_i32_0 = arith.constant 0 : i32
    return %arg0, %c0_i32 : i32, i32
  }
  func.func @transform_8(%arg0: i32) -> (i32, i32) {
    %c0_i32 = arith.constant 0 : i32
    %c0_i32_0 = arith.constant 0 : i32
    return %arg0, %c0_i32 : i32, i32
  }
}

</mosaic_0001>

<llo_original>
// kernel: tpu_custom_call.1
$region0: #{tpu_custom_call.1}
  #allocation0 [shape = 'u32[]', space=smem, size = 0x4, offset = 0x4, fixed_abs, tag = 'smem constant byte address 0x4 - core index']
  #allocation1 [shape = 'u32[144,128]{1,0:T(1,128)}', space=vmem, size = 0x12000, scoped, tag = 'internal scratch']
  %s0 = inlined_call_operand.hbm [shape: f32[8,128], index: 0, kind: input, shape index: {}]
  %s1 = inlined_call_operand.hbm [shape: bf16[128,512], index: 1, kind: input, shape index: {}]
  %s2 = inlined_call_operand.hbm [shape: bf16[512,256], index: 2, kind: input, shape index: {}]
  %s3 = inlined_call_operand.hbm [shape: bf16[256,128], index: 3, kind: input, shape index: {}]
  %s4 = inlined_call_operand.hbm [shape: bf16[128,128], index: 4, kind: input, shape index: {}]
  %s5 = inlined_call_operand.hbm [shape: bf16[128,128], index: 5, kind: input, shape index: {}]
  %s6 = inlined_call_operand.vmem [shape: f32[1,1152], index: 6, kind: input, shape index: {}]
  %s7 = inlined_call_operand.hbm [shape: f32[8,128], index: 7, kind: output, shape index: {0}]
  %s8 = inlined_call_operand.hbm [shape: f32[8,128], index: 8, kind: output, shape index: {1}]
  %9 = xla_tuple %s7, %s8
  %s10 = sld [smem:[#allocation0]]
  $region70: #{tpu_custom_call.1} parent=0
    _
  %s12 = ssub.s32 1, %s10
  %s13 = scalar_select 0, %s12, %s10
  $region1: #{tpu_custom_call.1} parent=0
    #allocation2 [shape = 'u8[4096]{0}', space=vmem, size = 0x1000, scoped, tag = 'input window, operand 0, single buffered']
    #allocation3 [shape = 's32[1]{0}', space=sflag, size = 0x4, scoped, tag = 'scoped memory for tpu_custom_call.1']
    #allocation4 [shape = 's32[1]{0}', space=sflag, size = 0x4, scoped, tag = 'scoped memory for tpu_custom_call.1']
    #allocation5 [shape = 'u8[131072]{0}', space=vmem, size = 0x20000, scoped, tag = 'input window, operand 1, single buffered']
    #allocation6 [shape = 's32[1]{0}', space=sflag, size = 0x4, scoped, tag = 'scoped memory for tpu_custom_call.1']
    #allocation7 [shape = 'u8[262144]{0}', space=vmem, size = 0x40000, scoped, tag = 'input window, operand 2, single buffered']
    #allocation8 [shape = 'u8[65536]{0}', space=vmem, size = 0x10000, scoped, tag = 'input window, operand 3, single buffered']
    #allocation9 [shape = 's32[1]{0}', space=sflag, size = 0x4, scoped, tag = 'scoped memory for tpu_custom_call.1']
    #allocation10 [shape = 'u8[32768]{0}', space=vmem, size = 0x8000, scoped, tag = 'input window, operand 4, single buffered']
    #allocation11 [shape = 'u8[32768]{0}', space=vmem, size = 0x8000, scoped, tag = 'input window, operand 5, single buffered']
    #allocation12 [shape = 's32[1]{0}', space=sflag, size = 0x4, scoped, tag = 'scoped memory for tpu_custom_call.1']
    #allocation13 [shape = 'u8[4096]{0}', space=vmem, size = 0x1000, scoped, tag = 'output window, operand 0, single buffered']
    #allocation14 [shape = 'u8[4096]{0}', space=vmem, size = 0x1000, scoped, tag = 'output window, operand 1, single buffered']
    #allocation15 [shape = 's32[1]{0}', space=sflag, size = 0x4, scoped, tag = 'scoped memory for tpu_custom_call.1']
    %14 = vsyncpa [#allocation3], 0
    %15 = vsyncpa [#allocation6], 0
    %16 = vsyncpa [#allocation9], 0
    %17 = vsyncpa [#allocation12], 0
    %18 = vsyncpa [#allocation4], 0
    %19 = vsyncpa [#allocation15], 0
    // Predicated region
    $region2: #{tpu_custom_call.1} parent=1 // pred_check
      _
    $region3: #{tpu_custom_call.1} parent=1 // pred_check_branch
      %21 = sbr.rel (0) target = $region5
    $region4: #{tpu_custom_call.1} parent=1 // pred_region
      %s23 = ssub.s32 128, 128
      %24 = vsyncadd [#allocation3], %s23
      %s26 = sshll.u32 [#allocation2], 4
      %s27 = int_to_ptr.vmem [resolvable:$true] %s26
      %29 = dma.hbm_to_vmem [thread:$0]  %s0, 128, %s27, [#allocation3]
    $region5: #{tpu_custom_call.1} parent=1 // pred_fallthru
      _
    // Predicated region
    $region6: #{tpu_custom_call.1} parent=1 // pred_check
      _
    $region7: #{tpu_custom_call.1} parent=1 // pred_check_branch
      %31 = sbr.rel (0) target = $region9
    $region8: #{tpu_custom_call.1} parent=1 // pred_region
      %s33 = ssub.s32 4096, 4096
      %34 = vsyncadd [#allocation6], %s33
      %s35 = sshll.u32 [#allocation5], 4
      %s36 = int_to_ptr.vmem [resolvable:$true] %s35
      %41 = dma.hbm_to_vmem [thread:$0]  %s1, 4096, %s36, [#allocation6], 256, 256, 16
    $region9: #{tpu_custom_call.1} parent=1 // pred_fallthru
      _
    // Predicated region
    $region10: #{tpu_custom_call.1} parent=1 // pred_check
      _
    $region11: #{tpu_custom_call.1} parent=1 // pred_check_branch
      %43 = sbr.rel (0) target = $region13
    $region12: #{tpu_custom_call.1} parent=1 // pred_region
      %s45 = ssub.s32 8192, 8192
      %46 = vsyncadd [#allocation6], %s45
      %s47 = sshll.u32 [#allocation7], 4
      %s48 = int_to_ptr.vmem [resolvable:$true] %s47
      %53 = dma.hbm_to_vmem [thread:$0]  %s2, 8192, %s48, [#allocation6], 128, 128, 8
    $region13: #{tpu_custom_call.1} parent=1 // pred_fallthru
      _
    // Predicated region
    $region14: #{tpu_custom_call.1} parent=1 // pred_check
      _
    $region15: #{tpu_custom_call.1} parent=1 // pred_check_branch
      %55 = sbr.rel (0) target = $region17
    $region16: #{tpu_custom_call.1} parent=1 // pred_region
      %s57 = ssub.s32 2048, 2048
      %58 = vsyncadd [#allocation9], %s57
      %s59 = sshll.u32 [#allocation8], 4
      %s60 = int_to_ptr.vmem [resolvable:$true] %s59
      %65 = dma.hbm_to_vmem [thread:$0]  %s3, 2048, %s60, [#allocation9], 64, 64, 4
    $region17: #{tpu_custom_call.1} parent=1 // pred_fallthru
      _
    // Predicated region
    $region18: #{tpu_custom_call.1} parent=1 // pred_check
      _
    $region19: #{tpu_custom_call.1} parent=1 // pred_check_branch
      %67 = sbr.rel (0) target = $region21
    $region20: #{tpu_custom_call.1} parent=1 // pred_region
      %s69 = ssub.s32 1024, 1024
      %70 = vsyncadd [#allocation9], %s69
      %s71 = sshll.u32 [#allocation10], 4
      %s72 = int_to_ptr.vmem [resolvable:$true] %s71
      %77 = dma.hbm_to_vmem [thread:$0]  %s4, 1024, %s72, [#allocation9], 64, 64, 4
    $region21: #{tpu_custom_call.1} parent=1 // pred_fallthru
      _
    // Predicated region
    $region22: #{tpu_custom_call.1} parent=1 // pred_check
      _
    $region23: #{tpu_custom_call.1} parent=1 // pred_check_branch
      %79 = sbr.rel (0) target = $region25
    $region24: #{tpu_custom_call.1} parent=1 // pred_region
      %s81 = ssub.s32 1024, 1024
      %82 = vsyncadd [#allocation12], %s81
      %s83 = sshll.u32 [#allocation11], 4
      %s84 = int_to_ptr.vmem [resolvable:$true] %s83
      %89 = dma.hbm_to_vmem [thread:$0]  %s5, 1024, %s84, [#allocation12], 64, 64, 4
    $region25: #{tpu_custom_call.1} parent=1 // pred_fallthru
      _
    // Predicated region
    $region26: #{tpu_custom_call.1} parent=1 // pred_check
      _
    $region27: #{tpu_custom_call.1} parent=1 // pred_check_branch
      %91 = sbr.rel (0) target = $region29
    $region28: #{tpu_custom_call.1} parent=1 // pred_region
      _
    $region29: #{tpu_custom_call.1} parent=1 // pred_fallthru
      _
    // Predicated region
    $region30: #{tpu_custom_call.1} parent=1 // pred_check
      _
    $region31: #{tpu_custom_call.1} parent=1 // pred_check_branch
      %93 = sbr.rel (0) target = $region33
    $region32: #{tpu_custom_call.1} parent=1 // pred_region
      %94 = dma.done [#allocation3], 128
    $region33: #{tpu_custom_call.1} parent=1 // pred_fallthru
      _
    // Predicated region
    $region34: #{tpu_custom_call.1} parent=1 // pred_check
      _
    $region35: #{tpu_custom_call.1} parent=1 // pred_check_branch
      %96 = sbr.rel (0) target = $region37
    $region36: #{tpu_custom_call.1} parent=1 // pred_region
      %97 = dma.done [#allocation6], 4096
    $region37: #{tpu_custom_call.1} parent=1 // pred_fallthru
      _
    // Predicated region
    $region38: #{tpu_custom_call.1} parent=1 // pred_check
      _
    $region39: #{tpu_custom_call.1} parent=1 // pred_check_branch
      %99 = sbr.rel (0) target = $region41
    $region40: #{tpu_custom_call.1} parent=1 // pred_region
      %100 = dma.done [#allocation6], 8192
    $region41: #{tpu_custom_call.1} parent=1 // pred_fallthru
      _
    // Predicated region
    $region42: #{tpu_custom_call.1} parent=1 // pred_check
      _
    $region43: #{tpu_custom_call.1} parent=1 // pred_check_branch
      %102 = sbr.rel (0) target = $region45
    $region44: #{tpu_custom_call.1} parent=1 // pred_region
      %103 = dma.done [#allocation9], 2048
    $region45: #{tpu_custom_call.1} parent=1 // pred_fallthru
      _
    // Predicated region
    $region46: #{tpu_custom_call.1} parent=1 // pred_check
      _
    $region47: #{tpu_custom_call.1} parent=1 // pred_check_branch
      %105 = sbr.rel (0) target = $region49
    $region48: #{tpu_custom_call.1} parent=1 // pred_region
      %106 = dma.done [#allocation9], 1024
    $region49: #{tpu_custom_call.1} parent=1 // pred_fallthru
      _
    // Predicated region
    $region50: #{tpu_custom_call.1} parent=1 // pred_check
      _
    $region51: #{tpu_custom_call.1} parent=1 // pred_check_branch
      %108 = sbr.rel (0) target = $region53
    $region52: #{tpu_custom_call.1} parent=1 // pred_region
      %109 = dma.done [#allocation12], 1024
    $region53: #{tpu_custom_call.1} parent=1 // pred_fallthru
      _
    %v111 = vld [vmem:[#allocation2] sm:$0xff]
    %v112 = vpack.c.bf16 %v111, %v111
    %v113 = vld [vmem:[#allocation5] sm:$0xff]
    %v114 = vld [vmem:[#allocation5 + $0x8] sm:$0xff]
    %v115 = vld [vmem:[#allocation5 + $0x10] sm:$0xff]
    %v116 = vld [vmem:[#allocation5 + $0x18] sm:$0xff]
    %v117 = vld [vmem:[#allocation5 + $0x20] sm:$0xff]
    %v118 = vld [vmem:[#allocation5 + $0x28] sm:$0xff]
    %v119 = vld [vmem:[#allocation5 + $0x30] sm:$0xff]
    %v120 = vld [vmem:[#allocation5 + $0x38] sm:$0xff]
    %v121 = vld [vmem:[#allocation5 + $0x40] sm:$0xff]
    %v122 = vld [vmem:[#allocation5 + $0x48] sm:$0xff]
    %v123 = vld [vmem:[#allocation5 + $0x50] sm:$0xff]
    %v124 = vld [vmem:[#allocation5 + $0x58] sm:$0xff]
    %v125 = vld [vmem:[#allocation5 + $0x60] sm:$0xff]
    %v126 = vld [vmem:[#allocation5 + $0x68] sm:$0xff]
    %v127 = vld [vmem:[#allocation5 + $0x70] sm:$0xff]
    %v128 = vld [vmem:[#allocation5 + $0x78] sm:$0xff]
    %v129 = vld [vmem:[#allocation5 + $0x80] sm:$0xff]
    %v130 = vld [vmem:[#allocation5 + $0x88] sm:$0xff]
    %v131 = vld [vmem:[#allocation5 + $0x90] sm:$0xff]
    %v132 = vld [vmem:[#allocation5 + $0x98] sm:$0xff]
    %v133 = vld [vmem:[#allocation5 + $0xa0] sm:$0xff]
    %v134 = vld [vmem:[#allocation5 + $0xa8] sm:$0xff]
    %v135 = vld [vmem:[#allocation5 + $0xb0] sm:$0xff]
    %v136 = vld [vmem:[#allocation5 + $0xb8] sm:$0xff]
    %v137 = vld [vmem:[#allocation5 + $0xc0] sm:$0xff]
    %v138 = vld [vmem:[#allocation5 + $0xc8] sm:$0xff]
    %v139 = vld [vmem:[#allocation5 + $0xd0] sm:$0xff]
    %v140 = vld [vmem:[#allocation5 + $0xd8] sm:$0xff]
    %v141 = vld [vmem:[#allocation5 + $0xe0] sm:$0xff]
    %v142 = vld [vmem:[#allocation5 + $0xe8] sm:$0xff]
    %v143 = vld [vmem:[#allocation5 + $0xf0] sm:$0xff]
    %v144 = vld [vmem:[#allocation5 + $0xf8] sm:$0xff]
    %v145 = vld [vmem:[%s6] sm:$0xf]
    %v147 = vlaneseq
    %v148 = vshrl.u32 %v147, 7
    %v149 = vsub.s32 0, %v148
    %v150 = vrot.slane %v145, %v149
    %v151 = vlaneseq
    %v152 = vshrl.u32 %v151, 7
    %v153 = vsub.s32 1, %v152
    %v154 = vrot.slane %v145, %v153
    %v155 = vlaneseq
    %v156 = vshrl.u32 %v155, 7
    %v157 = vsub.s32 2, %v156
    %v158 = vrot.slane %v145, %v157
    %v159 = vlaneseq
    %v160 = vshrl.u32 %v159, 7
    %v161 = vsub.s32 3, %v160
    %v162 = vrot.slane %v145, %v161
    %v199 = vunpack.c.l.b16 %v113
    %v200 = vunpack.c.h.b16 %v113
    %v201 = vunpack.c.l.b16 %v114
    %v202 = vunpack.c.h.b16 %v114
    %v203 = vunpack.c.l.b16 %v115
    %v204 = vunpack.c.h.b16 %v115
    %v205 = vunpack.c.l.b16 %v116
    %v206 = vunpack.c.h.b16 %v116
    %v207 = vunpack.c.l.b16 %v117
    %v208 = vunpack.c.h.b16 %v117
    %v209 = vunpack.c.l.b16 %v118
    %v210 = vunpack.c.h.b16 %v118
    %v211 = vunpack.c.l.b16 %v119
    %v212 = vunpack.c.h.b16 %v119
    %v213 = vunpack.c.l.b16 %v120
    %v214 = vunpack.c.h.b16 %v120
    %v215 = vunpack.c.l.b16 %v121
    %v216 = vunpack.c.h.b16 %v121
    %v217 = vunpack.c.l.b16 %v122
    %v218 = vunpack.c.h.b16 %v122
    %v219 = vunpack.c.l.b16 %v123
    %v220 = vunpack.c.h.b16 %v123
    %v221 = vunpack.c.l.b16 %v124
    %v222 = vunpack.c.h.b16 %v124
    %v223 = vunpack.c.l.b16 %v125
    %v224 = vunpack.c.h.b16 %v125
    %v225 = vunpack.c.l.b16 %v126
    %v226 = vunpack.c.h.b16 %v126
    %v227 = vunpack.c.l.b16 %v127
    %v228 = vunpack.c.h.b16 %v127
    %v229 = vunpack.c.l.b16 %v128
    %v230 = vunpack.c.h.b16 %v128
    %v231 = vunpack.c.l.b16 %v129
    %v232 = vunpack.c.h.b16 %v129
    %v233 = vunpack.c.l.b16 %v130
    %v234 = vunpack.c.h.b16 %v130
    %v235 = vunpack.c.l.b16 %v131
    %v236 = vunpack.c.h.b16 %v131
    %v237 = vunpack.c.l.b16 %v132
    %v238 = vunpack.c.h.b16 %v132
    %v239 = vunpack.c.l.b16 %v133
    %v240 = vunpack.c.h.b16 %v133
    %v241 = vunpack.c.l.b16 %v134
    %v242 = vunpack.c.h.b16 %v134
    %v243 = vunpack.c.l.b16 %v135
    %v244 = vunpack.c.h.b16 %v135
    %v245 = vunpack.c.l.b16 %v136
    %v246 = vunpack.c.h.b16 %v136
    %v247 = vunpack.c.l.b16 %v137
    %v248 = vunpack.c.h.b16 %v137
    %v249 = vunpack.c.l.b16 %v138
    %v250 = vunpack.c.h.b16 %v138
    %v251 = vunpack.c.l.b16 %v139
    %v252 = vunpack.c.h.b16 %v139
    %v253 = vunpack.c.l.b16 %v140
    %v254 = vunpack.c.h.b16 %v140
    %v255 = vunpack.c.l.b16 %v141
    %v256 = vunpack.c.h.b16 %v141
    %v257 = vunpack.c.l.b16 %v142
    %v258 = vunpack.c.h.b16 %v142
    %v259 = vunpack.c.l.b16 %v143
    %v260 = vunpack.c.h.b16 %v143
    %v261 = vunpack.c.l.b16 %v144
    %v262 = vunpack.c.h.b16 %v144
    %v263 = vpack.c.b16 %v203, %v199
    %v264 = vpack.c.b16 %v204, %v200
    %v265 = vpack.c.b16 %v205, %v201
    %v266 = vpack.c.b16 %v206, %v202
    %v267 = vpack.c.b16 %v211, %v207
    %v268 = vpack.c.b16 %v212, %v208
    %v269 = vpack.c.b16 %v213, %v209
    %v270 = vpack.c.b16 %v214, %v210
    %v271 = vpack.c.b16 %v219, %v215
    %v272 = vpack.c.b16 %v220, %v216
    %v273 = vpack.c.b16 %v221, %v217
    %v274 = vpack.c.b16 %v222, %v218
    %v275 = vpack.c.b16 %v227, %v223
    %v276 = vpack.c.b16 %v228, %v224
    %v277 = vpack.c.b16 %v229, %v225
    %v278 = vpack.c.b16 %v230, %v226
    %v279 = vpack.c.b16 %v235, %v231
    %v280 = vpack.c.b16 %v236, %v232
    %v281 = vpack.c.b16 %v237, %v233
    %v282 = vpack.c.b16 %v238, %v234
    %v283 = vpack.c.b16 %v243, %v239
    %v284 = vpack.c.b16 %v244, %v240
    %v285 = vpack.c.b16 %v245, %v241
    %v286 = vpack.c.b16 %v246, %v242
    %v287 = vpack.c.b16 %v251, %v247
    %v288 = vpack.c.b16 %v252, %v248
    %v289 = vpack.c.b16 %v253, %v249
    %v290 = vpack.c.b16 %v254, %v250
    %v291 = vpack.c.b16 %v259, %v255
    %v292 = vpack.c.b16 %v260, %v256
    %v293 = vpack.c.b16 %v261, %v257
    %v294 = vpack.c.b16 %v262, %v258
    %327 = vmatprep.subr.bf16.mxu0 %v264
    %328 = vmatpush1.bf16.msra.mxu0 %v263
    %329 = vmatprep.subr.bf16.mxu0 %v268
    %330 = vmatpush1.bf16.msra.mxu0 %v267
    %331 = vmatprep.subr.bf16.mxu0 %v272
    %332 = vmatpush1.bf16.msra.mxu0 %v271
    %333 = vmatprep.subr.bf16.mxu0 %v276
    %334 = vmatpush1.bf16.msra.mxu0 %v275
    %335 = vmatprep.subr.bf16.mxu0 %v280
    %336 = vmatpush1.bf16.msra.mxu0 %v279
    %337 = vmatprep.subr.bf16.mxu0 %v284
    %338 = vmatpush1.bf16.msra.mxu0 %v283
    %339 = vmatprep.subr.bf16.mxu0 %v288
    %340 = vmatpush1.bf16.msra.mxu0 %v287
    %341 = vmatprep.subr.bf16.mxu0 %v292
    %342 = vmatpush1.bf16.msra.mxu0 %v291
    %343 = vmatprep.subr.bf16.mxu0 0
    %344 = vmatpush1.bf16.msra.mxu0 0
    %345 = vmatprep.subr.bf16.mxu0 0
    %346 = vmatpush1.bf16.msra.mxu0 0
    %347 = vmatprep.subr.bf16.mxu0 0
    %348 = vmatpush1.bf16.msra.mxu0 0
    %349 = vmatprep.subr.bf16.mxu0 0
    %350 = vmatpush1.bf16.msra.mxu0 0
    %351 = vmatprep.subr.bf16.mxu0 0
    %352 = vmatpush1.bf16.msra.mxu0 0
    %353 = vmatprep.subr.bf16.mxu0 0
    %354 = vmatpush1.bf16.msra.mxu0 0
    %355 = vmatprep.subr.bf16.mxu0 0
    %356 = vmatpush1.bf16.msra.mxu0 0
    %357 = vmatprep.subr.bf16.mxu0 0
    %358 = vmatpush1.bf16.msra.mxu0 0
    %359 = vmatprep.mubr.bf16.mxu0 0
    %360 = vmatmul.mubr.bf16.gmra.mrb[0].mxu0 %v112
    %v361 = vpop.f32.mrb[0].mxu0
    %v362 = vadd.f32 %v150, %v361
    %v363 = vpop.f32.mrb[0].mxu0
    %v364 = vadd.f32 %v154, %v363
    %v365 = vpop.f32.mrb[0].mxu0
    %v366 = vpop.f32.mrb[0].mxu0
    %367 = vdwg.mxu0
    %368 = vmatprep.subr.bf16.mxu0 %v266
    %369 = vmatpush1.bf16.msra.mxu0 %v265
    %370 = vmatprep.subr.bf16.mxu0 %v270
    %371 = vmatpush1.bf16.msra.mxu0 %v269
    %372 = vmatprep.subr.bf16.mxu0 %v274
    %373 = vmatpush1.bf16.msra.mxu0 %v273
    %374 = vmatprep.subr.bf16.mxu0 %v278
    %375 = vmatpush1.bf16.msra.mxu0 %v277
    %376 = vmatprep.subr.bf16.mxu0 %v282
    %377 = vmatpush1.bf16.msra.mxu0 %v281
    %378 = vmatprep.subr.bf16.mxu0 %v286
    %379 = vmatpush1.bf16.msra.mxu0 %v285
    %380 = vmatprep.subr.bf16.mxu0 %v290
    %381 = vmatpush1.bf16.msra.mxu0 %v289
    %382 = vmatprep.subr.bf16.mxu0 %v294
    %383 = vmatpush1.bf16.msra.mxu0 %v293
    %384 = vmatprep.subr.bf16.mxu0 0
    %385 = vmatpush1.bf16.msra.mxu0 0
    %386 = vmatprep.subr.bf16.mxu0 0
    %387 = vmatpush1.bf16.msra.mxu0 0
    %388 = vmatprep.subr.bf16.mxu0 0
    %389 = vmatpush1.bf16.msra.mxu0 0
    %390 = vmatprep.subr.bf16.mxu0 0
    %391 = vmatpush1.bf16.msra.mxu0 0
    %392 = vmatprep.subr.bf16.mxu0 0
    %393 = vmatpush1.bf16.msra.mxu0 0
    %394 = vmatprep.subr.bf16.mxu0 0
    %395 = vmatpush1.bf16.msra.mxu0 0
    %396 = vmatprep.subr.bf16.mxu0 0
    %397 = vmatpush1.bf16.msra.mxu0 0
    %398 = vmatprep.subr.bf16.mxu0 0
    %399 = vmatpush1.bf16.msra.mxu0 0
    %400 = vmatprep.mubr.bf16.mxu0 0
    %401 = vmatmul.mubr.bf16.gmra.mrb[0].mxu0 %v112
    %v402 = vpop.f32.mrb[0].mxu0
    %v403 = vadd.f32 %v158, %v402
    %v404 = vpop.f32.mrb[0].mxu0
    %v405 = vadd.f32 %v162, %v404
    %v406 = vpop.f32.mrb[0].mxu0
    %v407 = vpop.f32.mrb[0].mxu0
    %408 = vdwg.mxu0
    %vm409 = vcmp.gt.f32.partialorder %v362, 0.0
    %vm410 = vcmp.gt.f32.partialorder %v364, 0.0
    %vm411 = vcmp.gt.f32.partialorder %v403, 0.0
    %vm412 = vcmp.gt.f32.partialorder %v405, 0.0
    %v413 = vmul.f32 %v362, 0.2
    %v414 = vmul.f32 %v364, 0.2
    %v415 = vmul.f32 %v403, 0.2
    %v416 = vmul.f32 %v405, 0.2
    %v417 = vsel %vm409, %v362, %v413
    %v418 = vsel %vm410, %v364, %v414
    %v419 = vsel %vm411, %v403, %v415
    %v420 = vsel %vm412, %v405, %v416
    %v421 = vpack.c.bf16 %v417, %v417
    %v422 = vpack.c.bf16 %v418, %v418
    %v423 = vpack.c.bf16 %v419, %v419
    %v424 = vpack.c.bf16 %v420, %v420
    %v425 = vld [vmem:[#allocation7] sm:$0xff]
    %v426 = vld [vmem:[#allocation7 + $0x8] sm:$0xff]
    %v427 = vld [vmem:[#allocation7 + $0x10] sm:$0xff]
    %v428 = vld [vmem:[#allocation7 + $0x18] sm:$0xff]
    %v429 = vld [vmem:[#allocation7 + $0x20] sm:$0xff]
    %v430 = vld [vmem:[#allocation7 + $0x28] sm:$0xff]
    %v431 = vld [vmem:[#allocation7 + $0x30] sm:$0xff]
    %v432 = vld [vmem:[#allocation7 + $0x38] sm:$0xff]
    %v433 = vld [vmem:[#allocation7 + $0x40] sm:$0xff]
    %v434 = vld [vmem:[#allocation7 + $0x48] sm:$0xff]
    %v435 = vld [vmem:[#allocation7 + $0x50] sm:$0xff]
    %v436 = vld [vmem:[#allocation7 + $0x58] sm:$0xff]
    %v437 = vld [vmem:[#allocation7 + $0x60] sm:$0xff]
    %v438 = vld [vmem:[#allocation7 + $0x68] sm:$0xff]
    %v439 = vld [vmem:[#allocation7 + $0x70] sm:$0xff]
    %v440 = vld [vmem:[#allocation7 + $0x78] sm:$0xff]
    %v441 = vld [vmem:[#allocation7 + $0x80] sm:$0xff]
    %v442 = vld [vmem:[#allocation7 + $0x88] sm:$0xff]
    %v443 = vld [vmem:[#allocation7 + $0x90] sm:$0xff]
    %v444 = vld [vmem:[#allocation7 + $0x98] sm:$0xff]
    %v445 = vld [vmem:[#allocation7 + $0xa0] sm:$0xff]
    %v446 = vld [vmem:[#allocation7 + $0xa8] sm:$0xff]
    %v447 = vld [vmem:[#allocation7 + $0xb0] sm:$0xff]
    %v448 = vld [vmem:[#allocation7 + $0xb8] sm:$0xff]
    %v449 = vld [vmem:[#allocation7 + $0xc0] sm:$0xff]
    %v450 = vld [vmem:[#allocation7 + $0xc8] sm:$0xff]
    %v451 = vld [vmem:[#allocation7 + $0xd0] sm:$0xff]
    %v452 = vld [vmem:[#allocation7 + $0xd8] sm:$0xff]
    %v453 = vld [vmem:[#allocation7 + $0xe0] sm:$0xff]
    %v454 = vld [vmem:[#allocation7 + $0xe8] sm:$0xff]
    %v455 = vld [vmem:[#allocation7 + $0xf0] sm:$0xff]
    %v456 = vld [vmem:[#allocation7 + $0xf8] sm:$0xff]
    %v457 = vld [vmem:[#allocation7 + $0x100] sm:$0xff]
    %v458 = vld [vmem:[#allocation7 + $0x108] sm:$0xff]
    %v459 = vld [vmem:[#allocation7 + $0x110] sm:$0xff]
    %v460 = vld [vmem:[#allocation7 + $0x118] sm:$0xff]
    %v461 = vld [vmem:[#allocation7 + $0x120] sm:$0xff]
    %v462 = vld [vmem:[#allocation7 + $0x128] sm:$0xff]
    %v463 = vld [vmem:[#allocation7 + $0x130] sm:$0xff]
    %v464 = vld [vmem:[#allocation7 + $0x138] sm:$0xff]
    %v465 = vld [vmem:[#allocation7 + $0x140] sm:$0xff]
    %v466 = vld [vmem:[#allocation7 + $0x148] sm:$0xff]
    %v467 = vld [vmem:[#allocation7 + $0x150] sm:$0xff]
    %v468 = vld [vmem:[#allocation7 + $0x158] sm:$0xff]
    %v469 = vld [vmem:[#allocation7 + $0x160] sm:$0xff]
    %v470 = vld [vmem:[#allocation7 + $0x168] sm:$0xff]
    %v471 = vld [vmem:[#allocation7 + $0x170] sm:$0xff]
    %v472 = vld [vmem:[#allocation7 + $0x178] sm:$0xff]
    %v473 = vld [vmem:[#allocation7 + $0x180] sm:$0xff]
    %v474 = vld [vmem:[#allocation7 + $0x188] sm:$0xff]
    %v475 = vld [vmem:[#allocation7 + $0x190] sm:$0xff]
    %v476 = vld [vmem:[#allocation7 + $0x198] sm:$0xff]
    %v477 = vld [vmem:[#allocation7 + $0x1a0] sm:$0xff]
    %v478 = vld [vmem:[#allocation7 + $0x1a8] sm:$0xff]
    %v479 = vld [vmem:[#allocation7 + $0x1b0] sm:$0xff]
    %v480 = vld [vmem:[#allocation7 + $0x1b8] sm:$0xff]
    %v481 = vld [vmem:[#allocation7 + $0x1c0] sm:$0xff]
    %v482 = vld [vmem:[#allocation7 + $0x1c8] sm:$0xff]
    %v483 = vld [vmem:[#allocation7 + $0x1d0] sm:$0xff]
    %v484 = vld [vmem:[#allocation7 + $0x1d8] sm:$0xff]
    %v485 = vld [vmem:[#allocation7 + $0x1e0] sm:$0xff]
    %v486 = vld [vmem:[#allocation7 + $0x1e8] sm:$0xff]
    %v487 = vld [vmem:[#allocation7 + $0x1f0] sm:$0xff]
    %v488 = vld [vmem:[#allocation7 + $0x1f8] sm:$0xff]
    %v489 = vld [vmem:[%s6 + $0x4] sm:$0x3]
    %v491 = vlaneseq
    %v492 = vshrl.u32 %v491, 7
    %v493 = vsub.s32 0, %v492
    %v494 = vrot.slane %v489, %v493
    %v495 = vlaneseq
    %v496 = vshrl.u32 %v495, 7
    %v497 = vsub.s32 1, %v496
    %v498 = vrot.slane %v489, %v497
    %v565 = vunpack.c.l.b16 %v425
    %v566 = vunpack.c.h.b16 %v425
    %v567 = vunpack.c.l.b16 %v426
    %v568 = vunpack.c.h.b16 %v426
    %v569 = vunpack.c.l.b16 %v427
    %v570 = vunpack.c.h.b16 %v427
    %v571 = vunpack.c.l.b16 %v428
    %v572 = vunpack.c.h.b16 %v428
    %v573 = vunpack.c.l.b16 %v429
    %v574 = vunpack.c.h.b16 %v429
    %v575 = vunpack.c.l.b16 %v430
    %v576 = vunpack.c.h.b16 %v430
    %v577 = vunpack.c.l.b16 %v431
    %v578 = vunpack.c.h.b16 %v431
    %v579 = vunpack.c.l.b16 %v432
    %v580 = vunpack.c.h.b16 %v432
    %v581 = vunpack.c.l.b16 %v433
    %v582 = vunpack.c.h.b16 %v433
    %v583 = vunpack.c.l.b16 %v434
    %v584 = vunpack.c.h.b16 %v434
    %v585 = vunpack.c.l.b16 %v435
    %v586 = vunpack.c.h.b16 %v435
    %v587 = vunpack.c.l.b16 %v436
    %v588 = vunpack.c.h.b16 %v436
    %v589 = vunpack.c.l.b16 %v437
    %v590 = vunpack.c.h.b16 %v437
    %v591 = vunpack.c.l.b16 %v438
    %v592 = vunpack.c.h.b16 %v438
    %v593 = vunpack.c.l.b16 %v439
    %v594 = vunpack.c.h.b16 %v439
    %v595 = vunpack.c.l.b16 %v440
    %v596 = vunpack.c.h.b16 %v440
    %v597 = vunpack.c.l.b16 %v441
    %v598 = vunpack.c.h.b16 %v441
    %v599 = vunpack.c.l.b16 %v442
    %v600 = vunpack.c.h.b16 %v442
    %v601 = vunpack.c.l.b16 %v443
    %v602 = vunpack.c.h.b16 %v443
    %v603 = vunpack.c.l.b16 %v444
    %v604 = vunpack.c.h.b16 %v444
    %v605 = vunpack.c.l.b16 %v445
    %v606 = vunpack.c.h.b16 %v445
    %v607 = vunpack.c.l.b16 %v446
    %v608 = vunpack.c.h.b16 %v446
    %v609 = vunpack.c.l.b16 %v447
    %v610 = vunpack.c.h.b16 %v447
    %v611 = vunpack.c.l.b16 %v448
    %v612 = vunpack.c.h.b16 %v448
    %v613 = vunpack.c.l.b16 %v449
    %v614 = vunpack.c.h.b16 %v449
    %v615 = vunpack.c.l.b16 %v450
    %v616 = vunpack.c.h.b16 %v450
    %v617 = vunpack.c.l.b16 %v451
    %v618 = vunpack.c.h.b16 %v451
    %v619 = vunpack.c.l.b16 %v452
    %v620 = vunpack.c.h.b16 %v452
    %v621 = vunpack.c.l.b16 %v453
    %v622 = vunpack.c.h.b16 %v453
    %v623 = vunpack.c.l.b16 %v454
    %v624 = vunpack.c.h.b16 %v454
    %v625 = vunpack.c.l.b16 %v455
    %v626 = vunpack.c.h.b16 %v455
    %v627 = vunpack.c.l.b16 %v456
    %v628 = vunpack.c.h.b16 %v456
    %v629 = vunpack.c.l.b16 %v457
    %v630 = vunpack.c.h.b16 %v457
    %v631 = vunpack.c.l.b16 %v458
    %v632 = vunpack.c.h.b16 %v458
    %v633 = vunpack.c.l.b16 %v459
    %v634 = vunpack.c.h.b16 %v459
    %v635 = vunpack.c.l.b16 %v460
    %v636 = vunpack.c.h.b16 %v460
    %v637 = vunpack.c.l.b16 %v461
    %v638 = vunpack.c.h.b16 %v461
    %v639 = vunpack.c.l.b16 %v462
    %v640 = vunpack.c.h.b16 %v462
    %v641 = vunpack.c.l.b16 %v463
    %v642 = vunpack.c.h.b16 %v463
    %v643 = vunpack.c.l.b16 %v464
    %v644 = vunpack.c.h.b16 %v464
    %v645 = vunpack.c.l.b16 %v465
    %v646 = vunpack.c.h.b16 %v465
    %v647 = vunpack.c.l.b16 %v466
    %v648 = vunpack.c.h.b16 %v466
    %v649 = vunpack.c.l.b16 %v467
    %v650 = vunpack.c.h.b16 %v467
    %v651 = vunpack.c.l.b16 %v468
    %v652 = vunpack.c.h.b16 %v468
    %v653 = vunpack.c.l.b16 %v469
    %v654 = vunpack.c.h.b16 %v469
    %v655 = vunpack.c.l.b16 %v470
    %v656 = vunpack.c.h.b16 %v470
    %v657 = vunpack.c.l.b16 %v471
    %v658 = vunpack.c.h.b16 %v471
    %v659 = vunpack.c.l.b16 %v472
    %v660 = vunpack.c.h.b16 %v472
    %v661 = vunpack.c.l.b16 %v473
    %v662 = vunpack.c.h.b16 %v473
    %v663 = vunpack.c.l.b16 %v474
    %v664 = vunpack.c.h.b16 %v474
    %v665 = vunpack.c.l.b16 %v475
    %v666 = vunpack.c.h.b16 %v475
    %v667 = vunpack.c.l.b16 %v476
    %v668 = vunpack.c.h.b16 %v476
    %v669 = vunpack.c.l.b16 %v477
    %v670 = vunpack.c.h.b16 %v477
    %v671 = vunpack.c.l.b16 %v478
    %v672 = vunpack.c.h.b16 %v478
    %v673 = vunpack.c.l.b16 %v479
    %v674 = vunpack.c.h.b16 %v479
    %v675 = vunpack.c.l.b16 %v480
    %v676 = vunpack.c.h.b16 %v480
    %v677 = vunpack.c.l.b16 %v481
    %v678 = vunpack.c.h.b16 %v481
    %v679 = vunpack.c.l.b16 %v482
    %v680 = vunpack.c.h.b16 %v482
    %v681 = vunpack.c.l.b16 %v483
    %v682 = vunpack.c.h.b16 %v483
    %v683 = vunpack.c.l.b16 %v484
    %v684 = vunpack.c.h.b16 %v484
    %v685 = vunpack.c.l.b16 %v485
    %v686 = vunpack.c.h.b16 %v485
    %v687 = vunpack.c.l.b16 %v486
    %v688 = vunpack.c.h.b16 %v486
    %v689 = vunpack.c.l.b16 %v487
    %v690 = vunpack.c.h.b16 %v487
    %v691 = vunpack.c.l.b16 %v488
    %v692 = vunpack.c.h.b16 %v488
    %v693 = vpack.c.b16 %v567, %v565
    %v694 = vpack.c.b16 %v568, %v566
    %v695 = vpack.c.b16 %v571, %v569
    %v696 = vpack.c.b16 %v572, %v570
    %v697 = vpack.c.b16 %v575, %v573
    %v698 = vpack.c.b16 %v576, %v574
    %v699 = vpack.c.b16 %v579, %v577
    %v700 = vpack.c.b16 %v580, %v578
    %v701 = vpack.c.b16 %v583, %v581
    %v702 = vpack.c.b16 %v584, %v582
    %v703 = vpack.c.b16 %v587, %v585
    %v704 = vpack.c.b16 %v588, %v586
    %v705 = vpack.c.b16 %v591, %v589
    %v706 = vpack.c.b16 %v592, %v590
    %v707 = vpack.c.b16 %v595, %v593
    %v708 = vpack.c.b16 %v596, %v594
    %v709 = vpack.c.b16 %v599, %v597
    %v710 = vpack.c.b16 %v600, %v598
    %v711 = vpack.c.b16 %v603, %v601
    %v712 = vpack.c.b16 %v604, %v602
    %v713 = vpack.c.b16 %v607, %v605
    %v714 = vpack.c.b16 %v608, %v606
    %v715 = vpack.c.b16 %v611, %v609
    %v716 = vpack.c.b16 %v612, %v610
    %v717 = vpack.c.b16 %v615, %v613
    %v718 = vpack.c.b16 %v616, %v614
    %v719 = vpack.c.b16 %v619, %v617
    %v720 = vpack.c.b16 %v620, %v618
    %v721 = vpack.c.b16 %v623, %v621
    %v722 = vpack.c.b16 %v624, %v622
    %v723 = vpack.c.b16 %v627, %v625
    %v724 = vpack.c.b16 %v628, %v626
    %v725 = vpack.c.b16 %v631, %v629
    %v726 = vpack.c.b16 %v632, %v630
    %v727 = vpack.c.b16 %v635, %v633
    %v728 = vpack.c.b16 %v636, %v634
    %v729 = vpack.c.b16 %v639, %v637
    %v730 = vpack.c.b16 %v640, %v638
    %v731 = vpack.c.b16 %v643, %v641
    %v732 = vpack.c.b16 %v644, %v642
    %v733 = vpack.c.b16 %v647, %v645
    %v734 = vpack.c.b16 %v648, %v646
    %v735 = vpack.c.b16 %v651, %v649
    %v736 = vpack.c.b16 %v652, %v650
    %v737 = vpack.c.b16 %v655, %v653
    %v738 = vpack.c.b16 %v656, %v654
    %v739 = vpack.c.b16 %v659, %v657
    %v740 = vpack.c.b16 %v660, %v658
    %v741 = vpack.c.b16 %v663, %v661
    %v742 = vpack.c.b16 %v664, %v662
    %v743 = vpack.c.b16 %v667, %v665
    %v744 = vpack.c.b16 %v668, %v666
    %v745 = vpack.c.b16 %v671, %v669
    %v746 = vpack.c.b16 %v672, %v670
    %v747 = vpack.c.b16 %v675, %v673
    %v748 = vpack.c.b16 %v676, %v674
    %v749 = vpack.c.b16 %v679, %v677
    %v750 = vpack.c.b16 %v680, %v678
    %v751 = vpack.c.b16 %v683, %v681
    %v752 = vpack.c.b16 %v684, %v682
    %v753 = vpack.c.b16 %v687, %v685
    %v754 = vpack.c.b16 %v688, %v686
    %v755 = vpack.c.b16 %v691, %v689
    %v756 = vpack.c.b16 %v692, %v690
    %821 = vmatprep.subr.bf16.mxu0 %v694
    %822 = vmatpush1.bf16.msra.mxu0 %v693
    %823 = vmatprep.subr.bf16.mxu0 %v696
    %824 = vmatpush1.bf16.msra.mxu0 %v695
    %825 = vmatprep.subr.bf16.mxu0 %v698
    %826 = vmatpush1.bf16.msra.mxu0 %v697
    %827 = vmatprep.subr.bf16.mxu0 %v700
    %828 = vmatpush1.bf16.msra.mxu0 %v699
    %829 = vmatprep.subr.bf16.mxu0 %v702
    %830 = vmatpush1.bf16.msra.mxu0 %v701
    %831 = vmatprep.subr.bf16.mxu0 %v704
    %832 = vmatpush1.bf16.msra.mxu0 %v703
    %833 = vmatprep.subr.bf16.mxu0 %v706
    %834 = vmatpush1.bf16.msra.mxu0 %v705
    %835 = vmatprep.subr.bf16.mxu0 %v708
    %836 = vmatpush1.bf16.msra.mxu0 %v707
    %837 = vmatprep.subr.bf16.mxu0 %v710
    %838 = vmatpush1.bf16.msra.mxu0 %v709
    %839 = vmatprep.subr.bf16.mxu0 %v712
    %840 = vmatpush1.bf16.msra.mxu0 %v711
    %841 = vmatprep.subr.bf16.mxu0 %v714
    %842 = vmatpush1.bf16.msra.mxu0 %v713
    %843 = vmatprep.subr.bf16.mxu0 %v716
    %844 = vmatpush1.bf16.msra.mxu0 %v715
    %845 = vmatprep.subr.bf16.mxu0 %v718
    %846 = vmatpush1.bf16.msra.mxu0 %v717
    %847 = vmatprep.subr.bf16.mxu0 %v720
    %848 = vmatpush1.bf16.msra.mxu0 %v719
    %849 = vmatprep.subr.bf16.mxu0 %v722
    %850 = vmatpush1.bf16.msra.mxu0 %v721
    %851 = vmatprep.subr.bf16.mxu0 %v724
    %852 = vmatpush1.bf16.msra.mxu0 %v723
    %853 = vmatprep.mubr.bf16.mxu0 %v422
    %854 = vmatmul.mubr.bf16.gmra.mrb[0].mxu0 %v421
    %v855 = vpop.f32.mrb[0].mxu0
    %v856 = vadd.f32 %v494, %v855
    %v857 = vpop.f32.mrb[0].mxu0
    %v858 = vadd.f32 %v498, %v857
    %v859 = vpop.f32.mrb[0].mxu0
    %v860 = vpop.f32.mrb[0].mxu0
    %861 = vdwg.mxu0
    %862 = vmatprep.subr.bf16.mxu0 %v726
    %863 = vmatpush1.bf16.msra.mxu0 %v725
    %864 = vmatprep.subr.bf16.mxu0 %v728
    %865 = vmatpush1.bf16.msra.mxu0 %v727
    %866 = vmatprep.subr.bf16.mxu0 %v730
    %867 = vmatpush1.bf16.msra.mxu0 %v729
    %868 = vmatprep.subr.bf16.mxu0 %v732
    %869 = vmatpush1.bf16.msra.mxu0 %v731
    %870 = vmatprep.subr.bf16.mxu0 %v734
    %871 = vmatpush1.bf16.msra.mxu0 %v733
    %872 = vmatprep.subr.bf16.mxu0 %v736
    %873 = vmatpush1.bf16.msra.mxu0 %v735
    %874 = vmatprep.subr.bf16.mxu0 %v738
    %875 = vmatpush1.bf16.msra.mxu0 %v737
    %876 = vmatprep.subr.bf16.mxu0 %v740
    %877 = vmatpush1.bf16.msra.mxu0 %v739
    %878 = vmatprep.subr.bf16.mxu0 %v742
    %879 = vmatpush1.bf16.msra.mxu0 %v741
    %880 = vmatprep.subr.bf16.mxu0 %v744
    %881 = vmatpush1.bf16.msra.mxu0 %v743
    %882 = vmatprep.subr.bf16.mxu0 %v746
    %883 = vmatpush1.bf16.msra.mxu0 %v745
    %884 = vmatprep.subr.bf16.mxu0 %v748
    %885 = vmatpush1.bf16.msra.mxu0 %v747
    %886 = vmatprep.subr.bf16.mxu0 %v750
    %887 = vmatpush1.bf16.msra.mxu0 %v749
    %888 = vmatprep.subr.bf16.mxu0 %v752
    %889 = vmatpush1.bf16.msra.mxu0 %v751
    %890 = vmatprep.subr.bf16.mxu0 %v754
    %891 = vmatpush1.bf16.msra.mxu0 %v753
    %892 = vmatprep.subr.bf16.mxu0 %v756
    %893 = vmatpush1.bf16.msra.mxu0 %v755
    %894 = vmatprep.mubr.bf16.mxu0 %v424
    %895 = vmatmul.mubr.bf16.gmra.mrb[0].mxu0 %v423
    %v896 = vpop.f32.mrb[0].mxu0
    %v897 = vadd.f32 %v856, %v896
    %v898 = vpop.f32.mrb[0].mxu0
    %v899 = vadd.f32 %v858, %v898
    %v900 = vpop.f32.mrb[0].mxu0
    %v901 = vpop.f32.mrb[0].mxu0
    %902 = vdwg.mxu0
    %vm903 = vcmp.gt.f32.partialorder %v897, 0.0
    %vm904 = vcmp.gt.f32.partialorder %v899, 0.0
    %v905 = vmul.f32 %v897, 0.2
    %v906 = vmul.f32 %v899, 0.2
    %v907 = vsel %vm903, %v897, %v905
    %v908 = vsel %vm904, %v899, %v906
    %v909 = vpack.c.bf16 %v907, %v907
    %v910 = vpack.c.bf16 %v908, %v908
    %v911 = vld [vmem:[#allocation8] sm:$0xf]
    %v912 = vld [vmem:[#allocation8 + $0x4] sm:$0xf]
    %v913 = vld [vmem:[#allocation8 + $0x8] sm:$0xf]
    %v914 = vld [vmem:[#allocation8 + $0xc] sm:$0xf]
    %v915 = vld [vmem:[#allocation8 + $0x10] sm:$0xf]
    %v916 = vld [vmem:[#allocation8 + $0x14] sm:$0xf]
    %v917 = vld [vmem:[#allocation8 + $0x18] sm:$0xf]
    %v918 = vld [vmem:[#allocation8 + $0x1c] sm:$0xf]
    %v919 = vld [vmem:[#allocation8 + $0x20] sm:$0xf]
    %v920 = vld [vmem:[#allocation8 + $0x24] sm:$0xf]
    %v921 = vld [vmem:[#allocation8 + $0x28] sm:$0xf]
    %v922 = vld [vmem:[#allocation8 + $0x2c] sm:$0xf]
    %v923 = vld [vmem:[#allocation8 + $0x30] sm:$0xf]
    %v924 = vld [vmem:[#allocation8 + $0x34] sm:$0xf]
    %v925 = vld [vmem:[#allocation8 + $0x38] sm:$0xf]
    %v926 = vld [vmem:[#allocation8 + $0x3c] sm:$0xf]
    %v927 = vld [vmem:[#allocation8 + $0x40] sm:$0xf]
    %v928 = vld [vmem:[#allocation8 + $0x44] sm:$0xf]
    %v929 = vld [vmem:[#allocation8 + $0x48] sm:$0xf]
    %v930 = vld [vmem:[#allocation8 + $0x4c] sm:$0xf]
    %v931 = vld [vmem:[#allocation8 + $0x50] sm:$0xf]
    %v932 = vld [vmem:[#allocation8 + $0x54] sm:$0xf]
    %v933 = vld [vmem:[#allocation8 + $0x58] sm:$0xf]
    %v934 = vld [vmem:[#allocation8 + $0x5c] sm:$0xf]
    %v935 = vld [vmem:[#allocation8 + $0x60] sm:$0xf]
    %v936 = vld [vmem:[#allocation8 + $0x64] sm:$0xf]
    %v937 = vld [vmem:[#allocation8 + $0x68] sm:$0xf]
    %v938 = vld [vmem:[#allocation8 + $0x6c] sm:$0xf]
    %v939 = vld [vmem:[#allocation8 + $0x70] sm:$0xf]
    %v940 = vld [vmem:[#allocation8 + $0x74] sm:$0xf]
    %v941 = vld [vmem:[#allocation8 + $0x78] sm:$0xf]
    %v942 = vld [vmem:[#allocation8 + $0x7c] sm:$0xf]
    %v943 = vld [vmem:[%s6 + $0x6] sm:$0x1]
    %v945 = vlaneseq
    %v946 = vshrl.u32 %v945, 7
    %v947 = vsub.s32 0, %v946
    %v948 = vrot.slane %v943, %v947
    %v982 = vunpack.c.l.b16 %v911
    %v983 = vunpack.c.l.b16 %v912
    %v984 = vunpack.c.l.b16 %v913
    %v985 = vunpack.c.l.b16 %v914
    %v986 = vunpack.c.l.b16 %v915
    %v987 = vunpack.c.l.b16 %v916
    %v988 = vunpack.c.l.b16 %v917
    %v989 = vunpack.c.l.b16 %v918
    %v990 = vunpack.c.l.b16 %v919
    %v991 = vunpack.c.l.b16 %v920
    %v992 = vunpack.c.l.b16 %v921
    %v993 = vunpack.c.l.b16 %v922
    %v994 = vunpack.c.l.b16 %v923
    %v995 = vunpack.c.l.b16 %v924
    %v996 = vunpack.c.l.b16 %v925
    %v997 = vunpack.c.l.b16 %v926
    %v998 = vunpack.c.l.b16 %v927
    %v999 = vunpack.c.l.b16 %v928
    %v1000 = vunpack.c.l.b16 %v929
    %v1001 = vunpack.c.l.b16 %v930
    %v1002 = vunpack.c.l.b16 %v931
    %v1003 = vunpack.c.l.b16 %v932
    %v1004 = vunpack.c.l.b16 %v933
    %v1005 = vunpack.c.l.b16 %v934
    %v1006 = vunpack.c.l.b16 %v935
    %v1007 = vunpack.c.l.b16 %v936
    %v1008 = vunpack.c.l.b16 %v937
    %v1009 = vunpack.c.l.b16 %v938
    %v1010 = vunpack.c.l.b16 %v939
    %v1011 = vunpack.c.l.b16 %v940
    %v1012 = vunpack.c.l.b16 %v941
    %v1013 = vunpack.c.l.b16 %v942
    %v1014 = vpack.c.b16 %v983, %v982
    %v1015 = vpack.c.b16 %v985, %v984
    %v1016 = vpack.c.b16 %v987, %v986
    %v1017 = vpack.c.b16 %v989, %v988
    %v1018 = vpack.c.b16 %v991, %v990
    %v1019 = vpack.c.b16 %v993, %v992
    %v1020 = vpack.c.b16 %v995, %v994
    %v1021 = vpack.c.b16 %v997, %v996
    %v1022 = vpack.c.b16 %v999, %v998
    %v1023 = vpack.c.b16 %v1001, %v1000
    %v1024 = vpack.c.b16 %v1003, %v1002
    %v1025 = vpack.c.b16 %v1005, %v1004
    %v1026 = vpack.c.b16 %v1007, %v1006
    %v1027 = vpack.c.b16 %v1009, %v1008
    %v1028 = vpack.c.b16 %v1011, %v1010
    %v1029 = vpack.c.b16 %v1013, %v1012
    %1046 = vmatprep.subr.bf16.mxu0 0
    %1047 = vmatpush1.bf16.msra.mxu0 %v1014
    %1048 = vmatprep.subr.bf16.mxu0 0
    %1049 = vmatpush1.bf16.msra.mxu0 %v1015
    %1050 = vmatprep.subr.bf16.mxu0 0
    %1051 = vmatpush1.bf16.msra.mxu0 %v1016
    %1052 = vmatprep.subr.bf16.mxu0 0
    %1053 = vmatpush1.bf16.msra.mxu0 %v1017
    %1054 = vmatprep.subr.bf16.mxu0 0
    %1055 = vmatpush1.bf16.msra.mxu0 %v1018
    %1056 = vmatprep.subr.bf16.mxu0 0
    %1057 = vmatpush1.bf16.msra.mxu0 %v1019
    %1058 = vmatprep.subr.bf16.mxu0 0
    %1059 = vmatpush1.bf16.msra.mxu0 %v1020
    %1060 = vmatprep.subr.bf16.mxu0 0
    %1061 = vmatpush1.bf16.msra.mxu0 %v1021
    %1062 = vmatprep.subr.bf16.mxu0 0
    %1063 = vmatpush1.bf16.msra.mxu0 %v1022
    %1064 = vmatprep.subr.bf16.mxu0 0
    %1065 = vmatpush1.bf16.msra.mxu0 %v1023
    %1066 = vmatprep.subr.bf16.mxu0 0
    %1067 = vmatpush1.bf16.msra.mxu0 %v1024
    %1068 = vmatprep.subr.bf16.mxu0 0
    %1069 = vmatpush1.bf16.msra.mxu0 %v1025
    %1070 = vmatprep.subr.bf16.mxu0 0
    %1071 = vmatpush1.bf16.msra.mxu0 %v1026
    %1072 = vmatprep.subr.bf16.mxu0 0
    %1073 = vmatpush1.bf16.msra.mxu0 %v1027
    %1074 = vmatprep.subr.bf16.mxu0 0
    %1075 = vmatpush1.bf16.msra.mxu0 %v1028
    %1076 = vmatprep.subr.bf16.mxu0 0
    %1077 = vmatpush1.bf16.msra.mxu0 %v1029
    %1078 = vmatprep.mubr.bf16.mxu0 %v910
    %1079 = vmatmul.mubr.bf16.gmra.mrb[0].mxu0 %v909
    %v1080 = vpop.f32.mrb[0].mxu0
    %v1081 = vadd.f32 %v948, %v1080
    %v1082 = vpop.f32.mrb[0].mxu0
    %v1083 = vpop.f32.mrb[0].mxu0
    %v1084 = vpop.f32.mrb[0].mxu0
    %1085 = vdwg.mxu0
    %vm1086 = vcmp.gt.f32.partialorder %v1081, 0.0
    %v1087 = vmul.f32 %v1081, 0.2
    %v1088 = vsel %vm1086, %v1081, %v1087
    %1089 = vst [vmem:[#allocation13] sm:$0xff] %v1088
    %v1090 = vpack.c.bf16 %v1088, %v1088
    %v1091 = vld [vmem:[#allocation10] sm:$0xf]
    %v1092 = vld [vmem:[#allocation10 + $0x4] sm:$0xf]
    %v1093 = vld [vmem:[#allocation10 + $0x8] sm:$0xf]
    %v1094 = vld [vmem:[#allocation10 + $0xc] sm:$0xf]
    %v1095 = vld [vmem:[#allocation10 + $0x10] sm:$0xf]
    %v1096 = vld [vmem:[#allocation10 + $0x14] sm:$0xf]
    %v1097 = vld [vmem:[#allocation10 + $0x18] sm:$0xf]
    %v1098 = vld [vmem:[#allocation10 + $0x1c] sm:$0xf]
    %v1099 = vld [vmem:[#allocation10 + $0x20] sm:$0xf]
    %v1100 = vld [vmem:[#allocation10 + $0x24] sm:$0xf]
    %v1101 = vld [vmem:[#allocation10 + $0x28] sm:$0xf]
    %v1102 = vld [vmem:[#allocation10 + $0x2c] sm:$0xf]
    %v1103 = vld [vmem:[#allocation10 + $0x30] sm:$0xf]
    %v1104 = vld [vmem:[#allocation10 + $0x34] sm:$0xf]
    %v1105 = vld [vmem:[#allocation10 + $0x38] sm:$0xf]
    %v1106 = vld [vmem:[#allocation10 + $0x3c] sm:$0xf]
    %v1107 = vld [vmem:[%s6 + $0x7] sm:$0x1]
    %v1109 = vlaneseq
    %v1110 = vshrl.u32 %v1109, 7
    %v1111 = vsub.s32 0, %v1110
    %v1112 = vrot.slane %v1107, %v1111
    %v1130 = vunpack.c.l.b16 %v1091
    %v1131 = vunpack.c.l.b16 %v1092
    %v1132 = vunpack.c.l.b16 %v1093
    %v1133 = vunpack.c.l.b16 %v1094
    %v1134 = vunpack.c.l.b16 %v1095
    %v1135 = vunpack.c.l.b16 %v1096
    %v1136 = vunpack.c.l.b16 %v1097
    %v1137 = vunpack.c.l.b16 %v1098
    %v1138 = vunpack.c.l.b16 %v1099
    %v1139 = vunpack.c.l.b16 %v1100
    %v1140 = vunpack.c.l.b16 %v1101
    %v1141 = vunpack.c.l.b16 %v1102
    %v1142 = vunpack.c.l.b16 %v1103
    %v1143 = vunpack.c.l.b16 %v1104
    %v1144 = vunpack.c.l.b16 %v1105
    %v1145 = vunpack.c.l.b16 %v1106
    %v1146 = vpack.c.b16 %v1131, %v1130
    %v1147 = vpack.c.b16 %v1133, %v1132
    %v1148 = vpack.c.b16 %v1135, %v1134
    %v1149 = vpack.c.b16 %v1137, %v1136
    %v1150 = vpack.c.b16 %v1139, %v1138
    %v1151 = vpack.c.b16 %v1141, %v1140
    %v1152 = vpack.c.b16 %v1143, %v1142
    %v1153 = vpack.c.b16 %v1145, %v1144
    %1162 = vmatprep.subr.bf16.mxu0 0
    %1163 = vmatpush1.bf16.msra.mxu0 %v1146
    %1164 = vmatprep.subr.bf16.mxu0 0
    %1165 = vmatpush1.bf16.msra.mxu0 %v1147
    %1166 = vmatprep.subr.bf16.mxu0 0
    %1167 = vmatpush1.bf16.msra.mxu0 %v1148
    %1168 = vmatprep.subr.bf16.mxu0 0
    %1169 = vmatpush1.bf16.msra.mxu0 %v1149
    %1170 = vmatprep.subr.bf16.mxu0 0
    %1171 = vmatpush1.bf16.msra.mxu0 %v1150
    %1172 = vmatprep.subr.bf16.mxu0 0
    %1173 = vmatpush1.bf16.msra.mxu0 %v1151
    %1174 = vmatprep.subr.bf16.mxu0 0
    %1175 = vmatpush1.bf16.msra.mxu0 %v1152
    %1176 = vmatprep.subr.bf16.mxu0 0
    %1177 = vmatpush1.bf16.msra.mxu0 %v1153
    %1178 = vmatprep.subr.bf16.mxu0 0
    %1179 = vmatpush1.bf16.msra.mxu0 0
    %1180 = vmatprep.subr.bf16.mxu0 0
    %1181 = vmatpush1.bf16.msra.mxu0 0
    %1182 = vmatprep.subr.bf16.mxu0 0
    %1183 = vmatpush1.bf16.msra.mxu0 0
    %1184 = vmatprep.subr.bf16.mxu0 0
    %1185 = vmatpush1.bf16.msra.mxu0 0
    %1186 = vmatprep.subr.bf16.mxu0 0
    %1187 = vmatpush1.bf16.msra.mxu0 0
    %1188 = vmatprep.subr.bf16.mxu0 0
    %1189 = vmatpush1.bf16.msra.mxu0 0
    %1190 = vmatprep.subr.bf16.mxu0 0
    %1191 = vmatpush1.bf16.msra.mxu0 0
    %1192 = vmatprep.subr.bf16.mxu0 0
    %1193 = vmatpush1.bf16.msra.mxu0 0
    %1194 = vmatprep.mubr.bf16.mxu0 0
    %1195 = vmatmul.mubr.bf16.gmra.mrb[0].mxu0 %v1090
    %v1196 = vpop.f32.mrb[0].mxu0
    %v1197 = vadd.f32 %v1112, %v1196
    %v1198 = vpop.f32.mrb[0].mxu0
    %v1199 = vpop.f32.mrb[0].mxu0
    %v1200 = vpop.f32.mrb[0].mxu0
    %1201 = vdwg.mxu0
    %vm1202 = vcmp.gt.f32.partialorder %v1197, 0.0
    %v1203 = vmul.f32 %v1197, 0.2
    %v1204 = vsel %vm1202, %v1197, %v1203
    %v1205 = vpack.c.bf16 %v1204, %v1204
    %v1206 = vld [vmem:[#allocation11] sm:$0xf]
    %v1207 = vld [vmem:[#allocation11 + $0x4] sm:$0xf]
    %v1208 = vld [vmem:[#allocation11 + $0x8] sm:$0xf]
    %v1209 = vld [vmem:[#allocation11 + $0xc] sm:$0xf]
    %v1210 = vld [vmem:[#allocation11 + $0x10] sm:$0xf]
    %v1211 = vld [vmem:[#allocation11 + $0x14] sm:$0xf]
    %v1212 = vld [vmem:[#allocation11 + $0x18] sm:$0xf]
    %v1213 = vld [vmem:[#allocation11 + $0x1c] sm:$0xf]
    %v1214 = vld [vmem:[#allocation11 + $0x20] sm:$0xf]
    %v1215 = vld [vmem:[#allocation11 + $0x24] sm:$0xf]
    %v1216 = vld [vmem:[#allocation11 + $0x28] sm:$0xf]
    %v1217 = vld [vmem:[#allocation11 + $0x2c] sm:$0xf]
    %v1218 = vld [vmem:[#allocation11 + $0x30] sm:$0xf]
    %v1219 = vld [vmem:[#allocation11 + $0x34] sm:$0xf]
    %v1220 = vld [vmem:[#allocation11 + $0x38] sm:$0xf]
    %v1221 = vld [vmem:[#allocation11 + $0x3c] sm:$0xf]
    %v1222 = vld [vmem:[%s6 + $0x8] sm:$0x1]
    %v1224 = vlaneseq
    %v1225 = vshrl.u32 %v1224, 7
    %v1226 = vsub.s32 0, %v1225
    %v1227 = vrot.slane %v1222, %v1226
    %v1245 = vunpack.c.l.b16 %v1206
    %v1246 = vunpack.c.l.b16 %v1207
    %v1247 = vunpack.c.l.b16 %v1208
    %v1248 = vunpack.c.l.b16 %v1209
    %v1249 = vunpack.c.l.b16 %v1210
    %v1250 = vunpack.c.l.b16 %v1211
    %v1251 = vunpack.c.l.b16 %v1212
    %v1252 = vunpack.c.l.b16 %v1213
    %v1253 = vunpack.c.l.b16 %v1214
    %v1254 = vunpack.c.l.b16 %v1215
    %v1255 = vunpack.c.l.b16 %v1216
    %v1256 = vunpack.c.l.b16 %v1217
    %v1257 = vunpack.c.l.b16 %v1218
    %v1258 = vunpack.c.l.b16 %v1219
    %v1259 = vunpack.c.l.b16 %v1220
    %v1260 = vunpack.c.l.b16 %v1221
    %v1261 = vpack.c.b16 %v1246, %v1245
    %v1262 = vpack.c.b16 %v1248, %v1247
    %v1263 = vpack.c.b16 %v1250, %v1249
    %v1264 = vpack.c.b16 %v1252, %v1251
    %v1265 = vpack.c.b16 %v1254, %v1253
    %v1266 = vpack.c.b16 %v1256, %v1255
    %v1267 = vpack.c.b16 %v1258, %v1257
    %v1268 = vpack.c.b16 %v1260, %v1259
    %1277 = vmatprep.subr.bf16.mxu0 0
    %1278 = vmatpush1.bf16.msra.mxu0 %v1261
    %1279 = vmatprep.subr.bf16.mxu0 0
    %1280 = vmatpush1.bf16.msra.mxu0 %v1262
    %1281 = vmatprep.subr.bf16.mxu0 0
    %1282 = vmatpush1.bf16.msra.mxu0 %v1263
    %1283 = vmatprep.subr.bf16.mxu0 0
    %1284 = vmatpush1.bf16.msra.mxu0 %v1264
    %1285 = vmatprep.subr.bf16.mxu0 0
    %1286 = vmatpush1.bf16.msra.mxu0 %v1265
    %1287 = vmatprep.subr.bf16.mxu0 0
    %1288 = vmatpush1.bf16.msra.mxu0 %v1266
    %1289 = vmatprep.subr.bf16.mxu0 0
    %1290 = vmatpush1.bf16.msra.mxu0 %v1267
    %1291 = vmatprep.subr.bf16.mxu0 0
    %1292 = vmatpush1.bf16.msra.mxu0 %v1268
    %1293 = vmatprep.subr.bf16.mxu0 0
    %1294 = vmatpush1.bf16.msra.mxu0 0
    %1295 = vmatprep.subr.bf16.mxu0 0
    %1296 = vmatpush1.bf16.msra.mxu0 0
    %1297 = vmatprep.subr.bf16.mxu0 0
    %1298 = vmatpush1.bf16.msra.mxu0 0
    %1299 = vmatprep.subr.bf16.mxu0 0
    %1300 = vmatpush1.bf16.msra.mxu0 0
    %1301 = vmatprep.subr.bf16.mxu0 0
    %1302 = vmatpush1.bf16.msra.mxu0 0
    %1303 = vmatprep.subr.bf16.mxu0 0
    %1304 = vmatpush1.bf16.msra.mxu0 0
    %1305 = vmatprep.subr.bf16.mxu0 0
    %1306 = vmatpush1.bf16.msra.mxu0 0
    %1307 = vmatprep.subr.bf16.mxu0 0
    %1308 = vmatpush1.bf16.msra.mxu0 0
    %1309 = vmatprep.mubr.bf16.mxu0 0
    %1310 = vmatmul.mubr.bf16.gmra.mrb[0].mxu0 %v1205
    %v1311 = vpop.f32.mrb[0].mxu0
    %v1312 = vadd.f32 %v1227, %v1311
    %v1313 = vpop.f32.mrb[0].mxu0
    %v1314 = vpop.f32.mrb[0].mxu0
    %v1315 = vpop.f32.mrb[0].mxu0
    %1316 = vdwg.mxu0
    %v1317 = vxor.u32 %v1312, 2147483648
    %v1318 = vmul.f32 %v1317, 1.442695
    %v1319 = vpow.pop %v1318
    %v1320 = vadd.f32 %v1319, 1.0
    %v1321 = vrcp.pop %v1320
    %v1322 = vmul.f32 1.0, %v1321
    %1323 = vst [vmem:[#allocation14] sm:$0xff] %v1322
    // Predicated region
    $region54: #{tpu_custom_call.1} parent=1 // pred_check
      _
    $region55: #{tpu_custom_call.1} parent=1 // pred_check_branch
      %1325 = sbr.rel (0) target = $region57
    $region56: #{tpu_custom_call.1} parent=1 // pred_region
      %s1327 = ssub.s32 128, 128
      %1328 = vsyncadd [#allocation4], %s1327
      %s1330 = sshll.u32 [#allocation13], 4
      %s1331 = int_to_ptr.vmem [resolvable:$true] %s1330
      %1333 = dma.vmem_to_hbm [thread:$0]  %s1331, 128, %s7, [#allocation4]
    $region57: #{tpu_custom_call.1} parent=1 // pred_fallthru
      _
    // Predicated region
    $region58: #{tpu_custom_call.1} parent=1 // pred_check
      _
    $region59: #{tpu_custom_call.1} parent=1 // pred_check_branch
      %1335 = sbr.rel (0) target = $region61
    $region60: #{tpu_custom_call.1} parent=1 // pred_region
      %s1337 = ssub.s32 128, 128
      %1338 = vsyncadd [#allocation15], %s1337
      %s1340 = sshll.u32 [#allocation14], 4
      %s1341 = int_to_ptr.vmem [resolvable:$true] %s1340
      %1343 = dma.vmem_to_hbm [thread:$0]  %s1341, 128, %s8, [#allocation15]
    $region61: #{tpu_custom_call.1} parent=1 // pred_fallthru
      _
    // Predicated region
    $region62: #{tpu_custom_call.1} parent=1 // pred_check
      _
    $region63: #{tpu_custom_call.1} parent=1 // pred_check_branch
      %1345 = sbr.rel (0) target = $region65
    $region64: #{tpu_custom_call.1} parent=1 // pred_region
      %1346 = dma.done [#allocation4], 128
    $region65: #{tpu_custom_call.1} parent=1 // pred_fallthru
      _
    // Predicated region
    $region66: #{tpu_custom_call.1} parent=1 // pred_check
      _
    $region67: #{tpu_custom_call.1} parent=1 // pred_check_branch
      %1348 = sbr.rel (0) target = $region69
    $region68: #{tpu_custom_call.1} parent=1 // pred_region
      %1349 = dma.done [#allocation15], 128
    $region69: #{tpu_custom_call.1} parent=1 // pred_fallthru
      _
    %1350 = vsyncpa [#allocation3], 1
    %1351 = vsyncpa [#allocation6], 1
    %1352 = vsyncpa [#allocation9], 1
    %1353 = vsyncpa [#allocation12], 1
    %1354 = vsyncpa [#allocation4], 1
    %1355 = vsyncpa [#allocation15], 1

</llo_original>
